<compile_context>
chip_gen: v7x
topology: tpu7x:2x2x1
jax: 0.10.0
libtpu: 0.0.40
codegen_flags: <defaults>
</compile_context>

<pallas_src>
import functools

import jax
import jax.numpy as jnp
from jax.experimental import pallas as pl
from jax.experimental.pallas import tpu as pltpu

EPS = 1e-5


def _round_up(x, m):
    return (x + m - 1) // m * m


# ----------------------------------------------------------------------------
# Fused kernel
#   grid = (image b [parallel], row tile t [arbitrary / GAP reduction])
#   per tile : stem conv (im2col matmul, bf16) + BN0 + SiLU
#              -> pointwise conv (bf16) + BN_pw + SiLU
#              -> masked GAP partial sum into a f32 VMEM accumulator
#   last tile: fc1+ReLU -> fc2+ReLU -> fc3 on pooled features, lane-dense
#              (class_n padded to 128 lanes) store.
# ----------------------------------------------------------------------------
def fused_timm_kernel(p_ref, ws_ref, bs_ref, wpw_ref, bpw_ref,
                      w1_ref, b1_ref, w2_ref, b2_ref, w3_ref, b3_ref,
                      o_ref, acc_ref, *, rows_per_img, tile_r):
    t = pl.program_id(1)

    @pl.when(t == 0)
    def _init():
        acc_ref[...] = jnp.zeros_like(acc_ref)

    def silu(h):
        # sigmoid = 1 / (1 + exp(-h)): EUP exp + EUP approx reciprocal.
        return h * pl.reciprocal(1.0 + jnp.exp(-h), approx=True)

    # stem conv (im2col matmul, bf16 operands, f32 acc) + folded BN0 + SiLU
    h = jnp.dot(p_ref[...], ws_ref[...],
                preferred_element_type=jnp.float32) + bs_ref[...]
    h = silu(h)

    # pointwise conv (bf16 operands, f32 acc) + folded BN_pw + SiLU
    h = jnp.dot(h.astype(jnp.bfloat16), wpw_ref[...],
                preferred_element_type=jnp.float32) + bpw_ref[...]
    h = silu(h)

    # masked GAP partial sum (handles ragged last row tile / OOB rows)
    row = t * tile_r + jax.lax.broadcasted_iota(jnp.int32, (tile_r, 1), 0)
    h = jnp.where(row < rows_per_img, h, 0.0)
    acc_ref[...] += jnp.sum(h, axis=0, keepdims=True)   # broadcasts to 8 rows

    @pl.when(t == pl.num_programs(1) - 1)
    def _head():
        # all 8 accumulator rows are identical; head is tiny (f32 on MXU)
        f = acc_ref[...] * (1.0 / rows_per_img)
        z = jnp.dot(f, w1_ref[...],
                    preferred_element_type=jnp.float32) + b1_ref[...]
        z = jnp.maximum(z, 0.0)                          # dropout = identity
        z = jnp.dot(z, w2_ref[...],
                    preferred_element_type=jnp.float32) + b2_ref[...]
        z = jnp.maximum(z, 0.0)
        o_ref[...] = jnp.dot(z, w3_ref[...],
                             preferred_element_type=jnp.float32) + b3_ref[...]


# ----------------------------------------------------------------------------
# Glue: im2col for the 3x3 stride-2 conv stem (pure index shuffling)
# ----------------------------------------------------------------------------
def im2col(x_nhwc, k=3, stride=2, pad=1):
    B, H, W, C = x_nhwc.shape
    xp = jnp.pad(x_nhwc, ((0, 0), (pad, pad), (pad, pad), (0, 0)))
    Ho = (H + 2 * pad - k) // stride + 1
    Wo = (W + 2 * pad - k) // stride + 1
    cols = []
    for di in range(k):
        for dj in range(k):
            cols.append(xp[:, di:di + Ho * stride:stride,
                           dj:dj + Wo * stride:stride, :])
    patches = jnp.concatenate(cols, axis=-1)              # [B, Ho, Wo, k*k*C]
    return patches.reshape(B, Ho * Wo, k * k * C), Ho, Wo


# ----------------------------------------------------------------------------
# Eval-mode BN folding into the preceding linear/conv
# ----------------------------------------------------------------------------
def fold_bn(w, b, bn):
    g, beta, m, v = bn
    scale = g * jax.lax.rsqrt(v + EPS)
    return w * scale[None, :], (b - m) * scale + beta


# ----------------------------------------------------------------------------
# Model params (surrogate backbone + exact MLP head structure)
# ----------------------------------------------------------------------------
def make_params(key, cin=3, c0=32, in_ch=128, class_n=5):
    ks = jax.random.split(key, 26)
    n = lambda k, s, sc=0.1: (sc * jax.random.normal(k, s)).astype(jnp.float32)
    u = lambda k, s: jax.random.uniform(k, s, minval=0.5, maxval=1.5).astype(jnp.float32)
    p = {}
    # surrogate backbone: conv stem (3x3 s2) + pointwise conv to in_ch
    p["w_stem"] = n(ks[0], (3 * 3 * cin, c0))
    p["b_stem"] = n(ks[1], (c0,))
    p["bn0"] = (u(ks[2], (c0,)), n(ks[3], (c0,)), n(ks[4], (c0,)), u(ks[5], (c0,)))
    p["w_pw"] = n(ks[6], (c0, in_ch))
    p["b_pw"] = n(ks[7], (in_ch,))
    p["bn_pw"] = (u(ks[8], (in_ch,)), n(ks[9], (in_ch,)),
                  n(ks[10], (in_ch,)), u(ks[11], (in_ch,)))
    # MLP head (exactly the module's fc1/bn1/fc2/bn2/fc3)
    h1, h2 = in_ch // 2, in_ch // 4
    p["w1"] = n(ks[12], (in_ch, h1)); p["b1"] = n(ks[13], (h1,))
    p["bn1"] = (u(ks[14], (h1,)), n(ks[15], (h1,)), n(ks[16], (h1,)), u(ks[17], (h1,)))
    p["w2"] = n(ks[18], (h1, h2)); p["b2"] = n(ks[19], (h2,))
    p["bn2"] = (u(ks[20], (h2,)), n(ks[21], (h2,)), n(ks[22], (h2,)), u(ks[23], (h2,)))
    p["w3"] = n(ks[24], (h2, class_n)); p["b3"] = n(ks[25], (class_n,))
    return p


# ----------------------------------------------------------------------------
# Wrapper: BN folding, bf16 casts, row-tiled pallas_call
# ----------------------------------------------------------------------------
def timm_forward_pallas(x_nchw, p):
    B = x_nchw.shape[0]
    class_n = p["w3"].shape[1]
    x_nhwc = jnp.transpose(x_nchw, (0, 2, 3, 1))
    patches, Ho, Wo = im2col(x_nhwc)                     # [B, P, 27]
    _, P, K = patches.shape

    K_pad = _round_up(K, 8)                              # contraction 27 -> 32
    N_pad = 128                                          # lane-dense fc3 output

    # TODO(synk): generation-specific TILE_R at real resolution (see header).
    TILE_R = min(1024, _round_up(P, 8))
    n_tiles = (P + TILE_R - 1) // TILE_R

    # cheap K pad only (no R pad), bf16 MXU operands for the big matmuls
    patches = jnp.pad(patches, ((0, 0), (0, 0), (0, K_pad - K))).astype(jnp.bfloat16)

    ws, bs = fold_bn(p["w_stem"], p["b_stem"], p["bn0"])
    ws = jnp.pad(ws, ((0, K_pad - K), (0, 0))).astype(jnp.bfloat16)
    wpw, bpw = fold_bn(p["w_pw"], p["b_pw"], p["bn_pw"])
    wpw = wpw.astype(jnp.bfloat16)
    w1, b1 = fold_bn(p["w1"], p["b1"], p["bn1"])
    w2, b2 = fold_bn(p["w2"], p["b2"], p["bn2"])
    w3 = jnp.pad(p["w3"], ((0, 0), (0, N_pad - class_n)))
    b3 = jnp.pad(p["b3"], ((0, N_pad - class_n),))

    c0 = ws.shape[1]
    in_ch = wpw.shape[1]
    h1 = w1.shape[1]
    h2 = w2.shape[1]

    r2 = lambda v: v.reshape(1, -1)
    # weights/biases: whole-array blocks, constant index map -> VMEM-resident
    const = lambda shape: pl.BlockSpec(shape, lambda b, t, _s=shape: (0,) * len(_s))

    out = pl.pallas_call(
        functools.partial(fused_timm_kernel, rows_per_img=P, tile_r=TILE_R),
        out_shape=jax.ShapeDtypeStruct((B, 8, N_pad), jnp.float32),
        grid=(B, n_tiles),
        in_specs=[
            pl.BlockSpec((None, TILE_R, K_pad), lambda b, t: (b, t, 0)),  # patches
            const((K_pad, c0)), const((1, c0)),                           # stem
            const((c0, in_ch)), const((1, in_ch)),                        # pointwise
            const((in_ch, h1)), const((1, h1)),                           # fc1
            const((h1, h2)), const((1, h2)),                              # fc2
            const((h2, N_pad)), const((1, N_pad)),                        # fc3
        ],
        out_specs=pl.BlockSpec((None, 8, N_pad), lambda b, t: (b, 0, 0)),
        scratch_shapes=[pltpu.VMEM((8, in_ch), jnp.float32)],             # GAP acc
        compiler_params=pltpu.CompilerParams(
            dimension_semantics=("parallel", "arbitrary"),
            vmem_limit_bytes=48 * 1024 * 1024),
    )(patches, ws, r2(bs), wpw, r2(bpw),
      w1, r2(b1), w2, r2(b2), w3, r2(b3))
    return out[:, 0, :class_n]


# ----------------------------------------------------------------------------
# Pure-JAX f32 reference (unfused, un-folded math) for a correctness check
# ----------------------------------------------------------------------------
def timm_forward_ref(x_nchw, p):
    x_nhwc = jnp.transpose(x_nchw, (0, 2, 3, 1))
    patches, Ho, Wo = im2col(x_nhwc)                     # [B, P, 27]
    bn = lambda h, q: (h - q[2]) * q[0] * jax.lax.rsqrt(q[3] + EPS) + q[1]
    silu = lambda h: h * jax.nn.sigmoid(h)

    h = silu(bn(patches @ p["w_stem"] + p["b_stem"], p["bn0"]))
    h = silu(bn(h @ p["w_pw"] + p["b_pw"], p["bn_pw"]))
    f = jnp.mean(h, axis=1)

    h = jnp.maximum(bn(f @ p["w1"] + p["b1"], p["bn1"]), 0.0)
    h = jnp.maximum(bn(h @ p["w2"] + p["b2"], p["bn2"]), 0.0)
    return h @ p["w3"] + p["b3"]


if __name__ == "__main__":
    key = jax.random.PRNGKey(0)
    kx, kp = jax.random.split(key)

    B, CIN, H, W = 2, 3, 16, 16
    x = jax.random.normal(kx, (B, CIN, H, W), dtype=jnp.float32)  # NCHW like PyTorch
    params = make_params(kp, cin=CIN, c0=32, in_ch=128, class_n=5)

    out = jax.block_until_ready(timm_forward_pallas(x, params))
    ref = jax.block_until_ready(timm_forward_ref(x, params))

    assert out.shape == (B, 5), out.shape
    # tolerance loosened for bf16 MXU operands + approx-reciprocal sigmoid
    assert jnp.allclose(out, ref, atol=5e-2, rtol=5e-2), (out, ref)
    print("KERNEL_OK")
</pallas_src>

<mosaic_0001>
module attributes {stable_mosaic.version = 11 : i64} {
  func.func @fused_timm_kernel(%arg0: i32, %arg1: i32, %arg2: memref<1x64x32xbf16, #tpu.memory_space<vmem>>, %arg3: memref<32x32xbf16, #tpu.memory_space<vmem>>, %arg4: memref<1x32xf32, #tpu.memory_space<vmem>>, %arg5: memref<32x128xbf16, #tpu.memory_space<vmem>>, %arg6: memref<1x128xf32, #tpu.memory_space<vmem>>, %arg7: memref<128x64xf32, #tpu.memory_space<vmem>>, %arg8: memref<1x64xf32, #tpu.memory_space<vmem>>, %arg9: memref<64x32xf32, #tpu.memory_space<vmem>>, %arg10: memref<1x32xf32, #tpu.memory_space<vmem>>, %arg11: memref<32x128xf32, #tpu.memory_space<vmem>>, %arg12: memref<1x128xf32, #tpu.memory_space<vmem>>, %arg13: memref<1x8x128xf32, #tpu.memory_space<vmem>>, %arg14: memref<8x128xf32, #tpu.memory_space<vmem>>) attributes {dimension_semantics = [#tpu.dimension_semantics<parallel>, #tpu.dimension_semantics<arbitrary>], iteration_bounds = array<i64: 2, 1>, scalar_prefetch = 0 : i64, scratch_operands = 1 : i64, tpu.core_type = #tpu.core_type<tc>, window_params = [{transform_indices = @transform_0, window_bounds = array<i64: 1, 64, 32>}, {pipeline_mode = #tpu.pipeline_mode<synchronous>, transform_indices = @transform_1, window_bounds = array<i64: 32, 32>}, {pipeline_mode = #tpu.pipeline_mode<synchronous>, transform_indices = @transform_2, window_bounds = array<i64: 1, 32>}, {pipeline_mode = #tpu.pipeline_mode<synchronous>, transform_indices = @transform_3, window_bounds = array<i64: 32, 128>}, {pipeline_mode = #tpu.pipeline_mode<synchronous>, transform_indices = @transform_4, window_bounds = array<i64: 1, 128>}, {pipeline_mode = #tpu.pipeline_mode<synchronous>, transform_indices = @transform_5, window_bounds = array<i64: 128, 64>}, {pipeline_mode = #tpu.pipeline_mode<synchronous>, transform_indices = @transform_6, window_bounds = array<i64: 1, 64>}, {pipeline_mode = #tpu.pipeline_mode<synchronous>, transform_indices = @transform_7, window_bounds = array<i64: 64, 32>}, {pipeline_mode = #tpu.pipeline_mode<synchronous>, transform_indices = @transform_8, window_bounds = array<i64: 1, 32>}, {pipeline_mode = #tpu.pipeline_mode<synchronous>, transform_indices = @transform_9, window_bounds = array<i64: 32, 128>}, {pipeline_mode = #tpu.pipeline_mode<synchronous>, transform_indices = @transform_10, window_bounds = array<i64: 1, 128>}, {transform_indices = @transform_11, window_bounds = array<i64: 1, 8, 128>}]} {
    %c0_i32 = arith.constant 0 : i32
    %0 = arith.cmpi eq, %arg1, %c0_i32 : i32
    %1 = arith.extui %0 : i1 to i32
    %c0_i32_0 = arith.constant 0 : i32
    %2 = arith.cmpi ne, %1, %c0_i32_0 : i32
    scf.if %2 {
      %cst_25 = arith.constant 0.000000e+00 : f32
      %49 = vector.broadcast %cst_25 : f32 to vector<8x128xf32>
      %c0_26 = arith.constant 0 : index
      %c0_27 = arith.constant 0 : index
      %50 = vector.load %arg14[%c0_26, %c0_27] : memref<8x128xf32, #tpu.memory_space<vmem>>, vector<8x128xf32>
      tpu.vector_store %arg14[%c0_26, %c0_27], %49 {strides = array<i32>} : memref<8x128xf32, #tpu.memory_space<vmem>>, vector<8x128xf32>,
    } else {
    }
    %c0 = arith.constant 0 : index
    %c0_1 = arith.constant 0 : index
    %c0_2 = arith.constant 0 : index
    %3 = vector.load %arg2[%c0, %c0_1, %c0_2] : memref<1x64x32xbf16, #tpu.memory_space<vmem>>, vector<1x64x32xbf16>
    %4 = vector.shape_cast %3 : vector<1x64x32xbf16> to vector<64x32xbf16>
    %c0_3 = arith.constant 0 : index
    %c0_4 = arith.constant 0 : index
    %5 = vector.load %arg3[%c0_3, %c0_4] : memref<32x32xbf16, #tpu.memory_space<vmem>>, vector<32x32xbf16>
    %cst = arith.constant dense<0.000000e+00> : vector<64x32xf32>
    %6 = tpu.matmul %4, %5, %cst {dimension_numbers = #tpu.dot_dimension_numbers<[1], [0], [0], [1], [0, 0, 1, 1], [], []>} : vector<64x32xbf16>, vector<32x32xbf16>, vector<64x32xf32> -> vector<64x32xf32>
    %c0_5 = arith.constant 0 : index
    %c0_6 = arith.constant 0 : index
    %7 = vector.load %arg4[%c0_5, %c0_6] : memref<1x32xf32, #tpu.memory_space<vmem>>, vector<1x32xf32>
    %8 = vector.broadcast %7 : vector<1x32xf32> to vector<64x32xf32>
    %9 = arith.addf %6, %8 : vector<64x32xf32>
    %cst_7 = arith.constant 0.000000e+00 : f32
    %10 = vector.broadcast %cst_7 : f32 to vector<64x32xf32>
    %11 = arith.subf %10, %9 : vector<64x32xf32>
    %12 = math.exp %11 : vector<64x32xf32>
    %cst_8 = arith.constant 1.000000e+00 : f32
    %13 = vector.broadcast %cst_8 : f32 to vector<64x32xf32>
    %14 = arith.addf %13, %12 : vector<64x32xf32>
    %15 = tpu.reciprocal %14 {approx = true} : vector<64x32xf32> -> vector<64x32xf32>
    %16 = arith.mulf %9, %15 : vector<64x32xf32>
    %17 = arith.truncf %16 : vector<64x32xf32> to vector<64x32xbf16>
    %c0_9 = arith.constant 0 : index
    %c0_10 = arith.constant 0 : index
    %18 = vector.load %arg5[%c0_9, %c0_10] : memref<32x128xbf16, #tpu.memory_space<vmem>>, vector<32x128xbf16>
    %cst_11 = arith.constant dense<0.000000e+00> : vector<64x128xf32>
    %19 = tpu.matmul %17, %18, %cst_11 {dimension_numbers = #tpu.dot_dimension_numbers<[1], [0], [0], [1], [0, 0, 1, 1], [], []>} : vector<64x32xbf16>, vector<32x128xbf16>, vector<64x128xf32> -> vector<64x128xf32>
    %c0_12 = arith.constant 0 : index
    %c0_13 = arith.constant 0 : index
    %20 = vector.load %arg6[%c0_12, %c0_13] : memref<1x128xf32, #tpu.memory_space<vmem>>, vector<1x128xf32>
    %21 = vector.broadcast %20 : vector<1x128xf32> to vector<64x128xf32>
    %22 = arith.addf %19, %21 : vector<64x128xf32>
    %cst_14 = arith.constant 0.000000e+00 : f32
    %23 = vector.broadcast %cst_14 : f32 to vector<64x128xf32>
    %24 = arith.subf %23, %22 : vector<64x128xf32>
    %25 = math.exp %24 : vector<64x128xf32>
    %cst_15 = arith.constant 1.000000e+00 : f32
    %26 = vector.broadcast %cst_15 : f32 to vector<64x128xf32>
    %27 = arith.addf %26, %25 : vector<64x128xf32>
    %28 = tpu.reciprocal %27 {approx = true} : vector<64x128xf32> -> vector<64x128xf32>
    %29 = arith.mulf %22, %28 : vector<64x128xf32>
    %c64_i32 = arith.constant 64 : i32
    %30 = arith.muli %arg1, %c64_i32 : i32
    %31 = tpu.iota {dimensions = array<i32: 0>} : vector<64x1xi32>
    %32 = vector.broadcast %30 : i32 to vector<64x1xi32>
    %33 = arith.addi %32, %31 : vector<64x1xi32>
    %c64_i32_16 = arith.constant 64 : i32
    %34 = vector.broadcast %c64_i32_16 : i32 to vector<64x1xi32>
    %35 = arith.cmpi slt, %33, %34 : vector<64x1xi32>
    %cst_17 = arith.constant 0.000000e+00 : f32
    %36 = vector.shape_cast %35 : vector<64x1xi1> to vector<64x1xi1>
    %37 = vector.broadcast %36 : vector<64x1xi1> to vector<64x128xi1>
    %38 = vector.broadcast %cst_17 : f32 to vector<64x128xf32>
    %39 = arith.select %37, %29, %38 : vector<64x128xi1>, vector<64x128xf32>
    %c0_18 = arith.constant 0 : index
    %c0_19 = arith.constant 0 : index
    %40 = vector.load %arg14[%c0_18, %c0_19] : memref<8x128xf32, #tpu.memory_space<vmem>>, vector<8x128xf32>
    %cst_20 = arith.constant dense<0.000000e+00> : vector<128xf32>
    %41 = vector.multi_reduction <add>, %39, %cst_20 [0] : vector<64x128xf32> to vector<128xf32>
    %42 = vector.shape_cast %41 : vector<128xf32> to vector<1x128xf32>
    %43 = vector.broadcast %42 : vector<1x128xf32> to vector<8x128xf32>
    %44 = arith.addf %40, %43 : vector<8x128xf32>
    %c0_21 = arith.constant 0 : index
    %c0_22 = arith.constant 0 : index
    %45 = vector.load %arg14[%c0_21, %c0_22] : memref<8x128xf32, #tpu.memory_space<vmem>>, vector<8x128xf32>
    tpu.vector_store %arg14[%c0_21, %c0_22], %44 {strides = array<i32>} : memref<8x128xf32, #tpu.memory_space<vmem>>, vector<8x128xf32>,
    %c0_i32_23 = arith.constant 0 : i32
    %46 = arith.cmpi eq, %arg1, %c0_i32_23 : i32
    %47 = arith.extui %46 : i1 to i32
    %c0_i32_24 = arith.constant 0 : i32
    %48 = arith.cmpi ne, %47, %c0_i32_24 : i32
    scf.if %48 {
      %c0_25 = arith.constant 0 : index
      %c0_26 = arith.constant 0 : index
      %49 = vector.load %arg14[%c0_25, %c0_26] : memref<8x128xf32, #tpu.memory_space<vmem>>, vector<8x128xf32>
      %cst_27 = arith.constant 1.562500e-02 : f32
      %50 = vector.broadcast %cst_27 : f32 to vector<8x128xf32>
      %51 = arith.mulf %49, %50 : vector<8x128xf32>
      %c0_28 = arith.constant 0 : index
      %c0_29 = arith.constant 0 : index
      %52 = vector.load %arg7[%c0_28, %c0_29] : memref<128x64xf32, #tpu.memory_space<vmem>>, vector<128x64xf32>
      %cst_30 = arith.constant dense<0.000000e+00> : vector<8x64xf32>
      %53 = tpu.matmul %51, %52, %cst_30 {dimension_numbers = #tpu.dot_dimension_numbers<[1], [0], [0], [1], [0, 0, 1, 1], [], []>} : vector<8x128xf32>, vector<128x64xf32>, vector<8x64xf32> -> vector<8x64xf32>
      %c0_31 = arith.constant 0 : index
      %c0_32 = arith.constant 0 : index
      %54 = vector.load %arg8[%c0_31, %c0_32] : memref<1x64xf32, #tpu.memory_space<vmem>>, vector<1x64xf32>
      %55 = vector.broadcast %54 : vector<1x64xf32> to vector<8x64xf32>
      %56 = arith.addf %53, %55 : vector<8x64xf32>
      %cst_33 = arith.constant 0.000000e+00 : f32
      %57 = vector.broadcast %cst_33 : f32 to vector<8x64xf32>
      %58 = arith.maximumf %56, %57 : vector<8x64xf32>
      %c0_34 = arith.constant 0 : index
      %c0_35 = arith.constant 0 : index
      %59 = vector.load %arg9[%c0_34, %c0_35] : memref<64x32xf32, #tpu.memory_space<vmem>>, vector<64x32xf32>
      %cst_36 = arith.constant dense<0.000000e+00> : vector<8x32xf32>
      %60 = tpu.matmul %58, %59, %cst_36 {dimension_numbers = #tpu.dot_dimension_numbers<[1], [0], [0], [1], [0, 0, 1, 1], [], []>} : vector<8x64xf32>, vector<64x32xf32>, vector<8x32xf32> -> vector<8x32xf32>
      %c0_37 = arith.constant 0 : index
      %c0_38 = arith.constant 0 : index
      %61 = vector.load %arg10[%c0_37, %c0_38] : memref<1x32xf32, #tpu.memory_space<vmem>>, vector<1x32xf32>
      %62 = vector.broadcast %61 : vector<1x32xf32> to vector<8x32xf32>
      %63 = arith.addf %60, %62 : vector<8x32xf32>
      %cst_39 = arith.constant 0.000000e+00 : f32
      %64 = vector.broadcast %cst_39 : f32 to vector<8x32xf32>
      %65 = arith.maximumf %63, %64 : vector<8x32xf32>
      %c0_40 = arith.constant 0 : index
      %c0_41 = arith.constant 0 : index
      %66 = vector.load %arg11[%c0_40, %c0_41] : memref<32x128xf32, #tpu.memory_space<vmem>>, vector<32x128xf32>
      %cst_42 = arith.constant dense<0.000000e+00> : vector<8x128xf32>
      %67 = tpu.matmul %65, %66, %cst_42 {dimension_numbers = #tpu.dot_dimension_numbers<[1], [0], [0], [1], [0, 0, 1, 1], [], []>} : vector<8x32xf32>, vector<32x128xf32>, vector<8x128xf32> -> vector<8x128xf32>
      %c0_43 = arith.constant 0 : index
      %c0_44 = arith.constant 0 : index
      %68 = vector.load %arg12[%c0_43, %c0_44] : memref<1x128xf32, #tpu.memory_space<vmem>>, vector<1x128xf32>
      %69 = vector.broadcast %68 : vector<1x128xf32> to vector<8x128xf32>
      %70 = arith.addf %67, %69 : vector<8x128xf32>
      %c0_45 = arith.constant 0 : index
      %c0_46 = arith.constant 0 : index
      %c0_47 = arith.constant 0 : index
      %71 = vector.load %arg13[%c0_45, %c0_46, %c0_47] : memref<1x8x128xf32, #tpu.memory_space<vmem>>, vector<1x8x128xf32>
      %72 = vector.shape_cast %71 : vector<1x8x128xf32> to vector<8x128xf32>
      %73 = vector.shape_cast %70 : vector<8x128xf32> to vector<1x8x128xf32>
      tpu.vector_store %arg13[%c0_45, %c0_46, %c0_47], %73 {strides = array<i32>} : memref<1x8x128xf32, #tpu.memory_space<vmem>>, vector<1x8x128xf32>,
    } else {
    }
    return
  }
  func.func @transform_0(%arg0: i32, %arg1: i32) -> (i32, i32, i32) {
    %c0_i32 = arith.constant 0 : i32
    %c0_i32_0 = arith.constant 0 : i32
    return %arg0, %arg1, %c0_i32 : i32, i32, i32
  }
  func.func @transform_1(%arg0: i32, %arg1: i32) -> (i32, i32) {
    %c0_i32 = arith.constant 0 : i32
    %c0_i32_0 = arith.constant 0 : i32
    %c0_i32_1 = arith.constant 0 : i32
    return %c0_i32, %c0_i32_0 : i32, i32
  }
  func.func @transform_2(%arg0: i32, %arg1: i32) -> (i32, i32) {
    %c0_i32 = arith.constant 0 : i32
    %c0_i32_0 = arith.constant 0 : i32
    %c0_i32_1 = arith.constant 0 : i32
    return %c0_i32, %c0_i32_0 : i32, i32
  }
  func.func @transform_3(%arg0: i32, %arg1: i32) -> (i32, i32) {
    %c0_i32 = arith.constant 0 : i32
    %c0_i32_0 = arith.constant 0 : i32
    %c0_i32_1 = arith.constant 0 : i32
    return %c0_i32, %c0_i32_0 : i32, i32
  }
  func.func @transform_4(%arg0: i32, %arg1: i32) -> (i32, i32) {
    %c0_i32 = arith.constant 0 : i32
    %c0_i32_0 = arith.constant 0 : i32
    %c0_i32_1 = arith.constant 0 : i32
    return %c0_i32, %c0_i32_0 : i32, i32
  }
  func.func @transform_5(%arg0: i32, %arg1: i32) -> (i32, i32) {
    %c0_i32 = arith.constant 0 : i32
    %c0_i32_0 = arith.constant 0 : i32
    %c0_i32_1 = arith.constant 0 : i32
    return %c0_i32, %c0_i32_0 : i32, i32
  }
  func.func @transform_6(%arg0: i32, %arg1: i32) -> (i32, i32) {
    %c0_i32 = arith.constant 0 : i32
    %c0_i32_0 = arith.constant 0 : i32
    %c0_i32_1 = arith.constant 0 : i32
    return %c0_i32, %c0_i32_0 : i32, i32
  }
  func.func @transform_7(%arg0: i32, %arg1: i32) -> (i32, i32) {
    %c0_i32 = arith.constant 0 : i32
    %c0_i32_0 = arith.constant 0 : i32
    %c0_i32_1 = arith.constant 0 : i32
    return %c0_i32, %c0_i32_0 : i32, i32
  }
  func.func @transform_8(%arg0: i32, %arg1: i32) -> (i32, i32) {
    %c0_i32 = arith.constant 0 : i32
    %c0_i32_0 = arith.constant 0 : i32
    %c0_i32_1 = arith.constant 0 : i32
    return %c0_i32, %c0_i32_0 : i32, i32
  }
  func.func @transform_9(%arg0: i32, %arg1: i32) -> (i32, i32) {
    %c0_i32 = arith.constant 0 : i32
    %c0_i32_0 = arith.constant 0 : i32
    %c0_i32_1 = arith.constant 0 : i32
    return %c0_i32, %c0_i32_0 : i32, i32
  }
  func.func @transform_10(%arg0: i32, %arg1: i32) -> (i32, i32) {
    %c0_i32 = arith.constant 0 : i32
    %c0_i32_0 = arith.constant 0 : i32
    %c0_i32_1 = arith.constant 0 : i32
    return %c0_i32, %c0_i32_0 : i32, i32
  }
  func.func @transform_11(%arg0: i32, %arg1: i32) -> (i32, i32, i32) {
    %c0_i32 = arith.constant 0 : i32
    %c0_i32_0 = arith.constant 0 : i32
    %c0_i32_1 = arith.constant 0 : i32
    return %arg0, %c0_i32, %c0_i32_0 : i32, i32, i32
  }
}

</mosaic_0001>

<llo_original>
// kernel: tpu_custom_call.1
$region0: #{tpu_custom_call.1}
  #allocation0 [shape = 'u32[]', space=smem, size = 0x4, offset = 0x4, fixed_abs, tag = 'smem constant byte address 0x4 - core index']
  #allocation1 [shape = 'u32[144,128]{1,0:T(1,128)}', space=vmem, size = 0x12000, scoped, tag = 'internal scratch']
  #allocation2 [shape = 'f32[8,128]{1,0:T(8,128)}', space=vmem, size = 0x1000, scoped, tag = 'scratch operand']
  %s0 = inlined_call_operand.vmem [shape: bf16[2,64,32], index: 0, kind: input, shape index: {}]
  %s1 = inlined_call_operand.vmem [shape: bf16[32,32], index: 1, kind: input, shape index: {}]
  %s2 = inlined_call_operand.vmem [shape: f32[1,32], index: 2, kind: input, shape index: {}]
  %s3 = inlined_call_operand.vmem [shape: bf16[32,128], index: 3, kind: input, shape index: {}]
  %s4 = inlined_call_operand.vmem [shape: f32[1,128], index: 4, kind: input, shape index: {}]
  %s5 = inlined_call_operand.vmem [shape: f32[128,64], index: 5, kind: input, shape index: {}]
  %s6 = inlined_call_operand.vmem [shape: f32[1,64], index: 6, kind: input, shape index: {}]
  %s7 = inlined_call_operand.vmem [shape: f32[64,32], index: 7, kind: input, shape index: {}]
  %s8 = inlined_call_operand.vmem [shape: f32[1,32], index: 8, kind: input, shape index: {}]
  %s9 = inlined_call_operand.vmem [shape: f32[32,128], index: 9, kind: input, shape index: {}]
  %s10 = inlined_call_operand.vmem [shape: f32[1,128], index: 10, kind: input, shape index: {}]
  %s11 = inlined_call_operand.hbm [shape: f32[2,8,128], index: 11, kind: output, shape index: {}]
  %s12 = sld [smem:[#allocation0]]
  $region85: #{tpu_custom_call.1} parent=0
    _
  %s14 = ssub.s32 1, %s12
  %s15 = scalar_select 0, %s14, %s12
  $region1: #{tpu_custom_call.1} parent=0
    #allocation3 [shape = 'u8[8192]{0}', space=vmem, size = 0x2000, scoped, tag = 'output window, operand 0']
    #allocation4 [shape = 's32[2]{0}', space=sflag, size = 0x8, scoped, tag = 'scoped memory for tpu_custom_call.1']
    %16 = vsyncpa [#allocation4], 0
    %s17 = scalar_lea.sflag [#allocation4], 1
    %18 = vsyncpa %s17, 0
    loop: start=0, step=1, limit=4
    $region2: #{tpu_custom_call.1} parent=1 // loop_pre_header
      _
    $region3: #{tpu_custom_call.1} parent=1 // loop_header
      %s20 = sphi 0, %s24
      %p21 = scmp.ge.s32.totalorder %s20, 4
      %s27 = sphi 0, %s39
      %s28 = sphi 0, %s35
      %s29 = sphi 0, %s27
      %s30 = sphi 0, %s28
      %s31 = sphi 0, %s29
      %s32 = sphi 0, %s30
      %s44 = sphi 0, %s46
      %s47 = sphi 0, %s44
      %s48 = sphi 0, %s47
      %s64 = sphi 0, %s48
      %s68 = sphi 0, %s68
      %s70 = sphi 0, %s68
      %s71 = sphi 0, %s70
      %s85 = sphi 0, %s71
      %s89 = sphi 0, %s89
      %s91 = sphi 0, %s89
      %s92 = sphi 0, %s91
      %s106 = sphi 0, %s92
      %s110 = sphi 0, %s110
      %s112 = sphi 0, %s110
      %s113 = sphi 0, %s112
      %s127 = sphi 0, %s113
      %s131 = sphi 0, %s131
      %s133 = sphi 0, %s131
      %s134 = sphi 0, %s133
      %s148 = sphi 0, %s134
      %s152 = sphi 0, %s152
      %s154 = sphi 0, %s152
      %s155 = sphi 0, %s154
      %s169 = sphi 0, %s155
      %s173 = sphi 0, %s173
      %s175 = sphi 0, %s173
      %s176 = sphi 0, %s175
      %s190 = sphi 0, %s176
      %s194 = sphi 0, %s194
      %s196 = sphi 0, %s194
      %s197 = sphi 0, %s196
      %s211 = sphi 0, %s197
      %s215 = sphi 0, %s215
      %s217 = sphi 0, %s215
      %s218 = sphi 0, %s217
      %s232 = sphi 0, %s218
      %s236 = sphi 0, %s236
      %s238 = sphi 0, %s236
      %s239 = sphi 0, %s238
      %s253 = sphi 0, %s239
      %s257 = sphi 0, %s257
      %s259 = sphi 0, %s257
      %s260 = sphi 0, %s259
      %s274 = sphi 0, %s260
      %s280 = sphi 0, %s282
      %s283 = sphi 0, %s280
      %s284 = sphi 0, %s283
      %s300 = sphi 0, %s284
    $region4: #{tpu_custom_call.1} parent=1 // loop_header_branch
      %23 = sbr.rel (%p21) target = $region8
    $region5: #{tpu_custom_call.1} parent=1 // loop_body
      %s25 = ssub.s32 %s20, 1
      %s26 = ssub.s32 %s20, 2
      %s33 = sadd.s32 1, %s28
      %p34 = scmp.ge.s32.totalorder %s33, 1
      %s35 = scalar_select %p34, 0, %s33
      %s36 = sadd.s32 1, %s27
      %s37 = scalar_select %p34, %s36, %s27
      %p38 = scmp.ge.s32.totalorder %s37, 2
      %s39 = scalar_select %p38, 0, %s37
      %s40 = ssub.s32 %s27, %s39
      %s41 = ssub.s32 %s28, %s35
      %s42 = sor.u32 %s40, %s41
      %p43 = scmp.eq.s32.totalorder %s42, 0
      %s45 = sadd.s32 %s44, 1
      %s46 = scalar_select %p43, %s44, %s45
      %p49 = pneg %p43
      %p50 = scmp.eq.s32.totalorder %s20, 1
      %p51 = por %p49, %p50
      %p52 = scmp.ne.s32.totalorder %s44, %s47
      %p53 = scmp.eq.s32.totalorder %s20, 0
      %p54 = por %p52, %p53
      %p55 = scmp.ne.s32.totalorder %s44, %s47
      %p56 = scmp.eq.s32.totalorder %s25, 1
      %p57 = por %p55, %p56
      %p58 = scmp.ne.s32.totalorder %s47, %s48
      %p59 = scmp.eq.s32.totalorder %s25, 0
      %p60 = por %p58, %p59
      %p61 = scmp.ne.s32.totalorder %s47, %s48
      %p62 = scmp.eq.s32.totalorder %s26, 1
      %p63 = por %p61, %p62
      %p65 = scmp.ne.s32.totalorder %s48, %s64
      %p66 = scmp.eq.s32.totalorder %s26, 0
      %p67 = por %p65, %p66
      %s69 = sadd.s32 %s68, 1
      %p72 = scmp.eq.s32.totalorder %s20, 1
      %p73 = scmp.ne.s32.totalorder %s68, %s70
      %p74 = scmp.eq.s32.totalorder %s20, 0
      %p75 = por %p73, %p74
      %p76 = scmp.ne.s32.totalorder %s68, %s70
      %p77 = scmp.eq.s32.totalorder %s25, 1
      %p78 = por %p76, %p77
      %p79 = scmp.ne.s32.totalorder %s70, %s71
      %p80 = scmp.eq.s32.totalorder %s25, 0
      %p81 = por %p79, %p80
      %p82 = scmp.ne.s32.totalorder %s70, %s71
      %p83 = scmp.eq.s32.totalorder %s26, 1
      %p84 = por %p82, %p83
      %p86 = scmp.ne.s32.totalorder %s71, %s85
      %p87 = scmp.eq.s32.totalorder %s26, 0
      %p88 = por %p86, %p87
      %s90 = sadd.s32 %s89, 1
      %p93 = scmp.eq.s32.totalorder %s20, 1
      %p94 = scmp.ne.s32.totalorder %s89, %s91
      %p95 = scmp.eq.s32.totalorder %s20, 0
      %p96 = por %p94, %p95
      %p97 = scmp.ne.s32.totalorder %s89, %s91
      %p98 = scmp.eq.s32.totalorder %s25, 1
      %p99 = por %p97, %p98
      %p100 = scmp.ne.s32.totalorder %s91, %s92
      %p101 = scmp.eq.s32.totalorder %s25, 0
      %p102 = por %p100, %p101
      %p103 = scmp.ne.s32.totalorder %s91, %s92
      %p104 = scmp.eq.s32.totalorder %s26, 1
      %p105 = por %p103, %p104
      %p107 = scmp.ne.s32.totalorder %s92, %s106
      %p108 = scmp.eq.s32.totalorder %s26, 0
      %p109 = por %p107, %p108
      %s111 = sadd.s32 %s110, 1
      %p114 = scmp.eq.s32.totalorder %s20, 1
      %p115 = scmp.ne.s32.totalorder %s110, %s112
      %p116 = scmp.eq.s32.totalorder %s20, 0
      %p117 = por %p115, %p116
      %p118 = scmp.ne.s32.totalorder %s110, %s112
      %p119 = scmp.eq.s32.totalorder %s25, 1
      %p120 = por %p118, %p119
      %p121 = scmp.ne.s32.totalorder %s112, %s113
      %p122 = scmp.eq.s32.totalorder %s25, 0
      %p123 = por %p121, %p122
      %p124 = scmp.ne.s32.totalorder %s112, %s113
      %p125 = scmp.eq.s32.totalorder %s26, 1
      %p126 = por %p124, %p125
      %p128 = scmp.ne.s32.totalorder %s113, %s127
      %p129 = scmp.eq.s32.totalorder %s26, 0
      %p130 = por %p128, %p129
      %s132 = sadd.s32 %s131, 1
      %p135 = scmp.eq.s32.totalorder %s20, 1
      %p136 = scmp.ne.s32.totalorder %s131, %s133
      %p137 = scmp.eq.s32.totalorder %s20, 0
      %p138 = por %p136, %p137
      %p139 = scmp.ne.s32.totalorder %s131, %s133
      %p140 = scmp.eq.s32.totalorder %s25, 1
      %p141 = por %p139, %p140
      %p142 = scmp.ne.s32.totalorder %s133, %s134
      %p143 = scmp.eq.s32.totalorder %s25, 0
      %p144 = por %p142, %p143
      %p145 = scmp.ne.s32.totalorder %s133, %s134
      %p146 = scmp.eq.s32.totalorder %s26, 1
      %p147 = por %p145, %p146
      %p149 = scmp.ne.s32.totalorder %s134, %s148
      %p150 = scmp.eq.s32.totalorder %s26, 0
      %p151 = por %p149, %p150
      %s153 = sadd.s32 %s152, 1
      %p156 = scmp.eq.s32.totalorder %s20, 1
      %p157 = scmp.ne.s32.totalorder %s152, %s154
      %p158 = scmp.eq.s32.totalorder %s20, 0
      %p159 = por %p157, %p158
      %p160 = scmp.ne.s32.totalorder %s152, %s154
      %p161 = scmp.eq.s32.totalorder %s25, 1
      %p162 = por %p160, %p161
      %p163 = scmp.ne.s32.totalorder %s154, %s155
      %p164 = scmp.eq.s32.totalorder %s25, 0
      %p165 = por %p163, %p164
      %p166 = scmp.ne.s32.totalorder %s154, %s155
      %p167 = scmp.eq.s32.totalorder %s26, 1
      %p168 = por %p166, %p167
      %p170 = scmp.ne.s32.totalorder %s155, %s169
      %p171 = scmp.eq.s32.totalorder %s26, 0
      %p172 = por %p170, %p171
      %s174 = sadd.s32 %s173, 1
      %p177 = scmp.eq.s32.totalorder %s20, 1
      %p178 = scmp.ne.s32.totalorder %s173, %s175
      %p179 = scmp.eq.s32.totalorder %s20, 0
      %p180 = por %p178, %p179
      %p181 = scmp.ne.s32.totalorder %s173, %s175
      %p182 = scmp.eq.s32.totalorder %s25, 1
      %p183 = por %p181, %p182
      %p184 = scmp.ne.s32.totalorder %s175, %s176
      %p185 = scmp.eq.s32.totalorder %s25, 0
      %p186 = por %p184, %p185
      %p187 = scmp.ne.s32.totalorder %s175, %s176
      %p188 = scmp.eq.s32.totalorder %s26, 1
      %p189 = por %p187, %p188
      %p191 = scmp.ne.s32.totalorder %s176, %s190
      %p192 = scmp.eq.s32.totalorder %s26, 0
      %p193 = por %p191, %p192
      %s195 = sadd.s32 %s194, 1
      %p198 = scmp.eq.s32.totalorder %s20, 1
      %p199 = scmp.ne.s32.totalorder %s194, %s196
      %p200 = scmp.eq.s32.totalorder %s20, 0
      %p201 = por %p199, %p200
      %p202 = scmp.ne.s32.totalorder %s194, %s196
      %p203 = scmp.eq.s32.totalorder %s25, 1
      %p204 = por %p202, %p203
      %p205 = scmp.ne.s32.totalorder %s196, %s197
      %p206 = scmp.eq.s32.totalorder %s25, 0
      %p207 = por %p205, %p206
      %p208 = scmp.ne.s32.totalorder %s196, %s197
      %p209 = scmp.eq.s32.totalorder %s26, 1
      %p210 = por %p208, %p209
      %p212 = scmp.ne.s32.totalorder %s197, %s211
      %p213 = scmp.eq.s32.totalorder %s26, 0
      %p214 = por %p212, %p213
      %s216 = sadd.s32 %s215, 1
      %p219 = scmp.eq.s32.totalorder %s20, 1
      %p220 = scmp.ne.s32.totalorder %s215, %s217
      %p221 = scmp.eq.s32.totalorder %s20, 0
      %p222 = por %p220, %p221
      %p223 = scmp.ne.s32.totalorder %s215, %s217
      %p224 = scmp.eq.s32.totalorder %s25, 1
      %p225 = por %p223, %p224
      %p226 = scmp.ne.s32.totalorder %s217, %s218
      %p227 = scmp.eq.s32.totalorder %s25, 0
      %p228 = por %p226, %p227
      %p229 = scmp.ne.s32.totalorder %s217, %s218
      %p230 = scmp.eq.s32.totalorder %s26, 1
      %p231 = por %p229, %p230
      %p233 = scmp.ne.s32.totalorder %s218, %s232
      %p234 = scmp.eq.s32.totalorder %s26, 0
      %p235 = por %p233, %p234
      %s237 = sadd.s32 %s236, 1
      %p240 = scmp.eq.s32.totalorder %s20, 1
      %p241 = scmp.ne.s32.totalorder %s236, %s238
      %p242 = scmp.eq.s32.totalorder %s20, 0
      %p243 = por %p241, %p242
      %p244 = scmp.ne.s32.totalorder %s236, %s238
      %p245 = scmp.eq.s32.totalorder %s25, 1
      %p246 = por %p244, %p245
      %p247 = scmp.ne.s32.totalorder %s238, %s239
      %p248 = scmp.eq.s32.totalorder %s25, 0
      %p249 = por %p247, %p248
      %p250 = scmp.ne.s32.totalorder %s238, %s239
      %p251 = scmp.eq.s32.totalorder %s26, 1
      %p252 = por %p250, %p251
      %p254 = scmp.ne.s32.totalorder %s239, %s253
      %p255 = scmp.eq.s32.totalorder %s26, 0
      %p256 = por %p254, %p255
      %s258 = sadd.s32 %s257, 1
      %p261 = scmp.eq.s32.totalorder %s20, 1
      %p262 = scmp.ne.s32.totalorder %s257, %s259
      %p263 = scmp.eq.s32.totalorder %s20, 0
      %p264 = por %p262, %p263
      %p265 = scmp.ne.s32.totalorder %s257, %s259
      %p266 = scmp.eq.s32.totalorder %s25, 1
      %p267 = por %p265, %p266
      %p268 = scmp.ne.s32.totalorder %s259, %s260
      %p269 = scmp.eq.s32.totalorder %s25, 0
      %p270 = por %p268, %p269
      %p271 = scmp.ne.s32.totalorder %s259, %s260
      %p272 = scmp.eq.s32.totalorder %s26, 1
      %p273 = por %p271, %p272
      %p275 = scmp.ne.s32.totalorder %s260, %s274
      %p276 = scmp.eq.s32.totalorder %s26, 0
      %p277 = por %p275, %p276
      %s278 = ssub.s32 %s27, %s39
      %p279 = scmp.eq.s32.totalorder %s278, 0
      %s281 = sadd.s32 %s280, 1
      %s282 = scalar_select %p279, %s280, %s281
      %p285 = pneg %p279
      %p286 = scmp.eq.s32.totalorder %s20, 1
      %p287 = por %p285, %p286
      %p288 = scmp.ne.s32.totalorder %s280, %s283
      %p289 = scmp.eq.s32.totalorder %s20, 0
      %p290 = por %p288, %p289
      %p291 = scmp.ne.s32.totalorder %s280, %s283
      %p292 = scmp.eq.s32.totalorder %s25, 1
      %p293 = por %p291, %p292
      %p294 = scmp.ne.s32.totalorder %s283, %s284
      %p295 = scmp.eq.s32.totalorder %s25, 0
      %p296 = por %p294, %p295
      %p297 = scmp.ne.s32.totalorder %s283, %s284
      %p298 = scmp.eq.s32.totalorder %s26, 1
      %p299 = por %p297, %p298
      %p301 = scmp.ne.s32.totalorder %s284, %s300
      %p302 = scmp.eq.s32.totalorder %s26, 0
      %p303 = por %p301, %p302
      %p304 = scmp.le.s32.totalorder 1, %s20
      %p305 = scmp.lt.s32.totalorder %s20, 3
      %p306 = pnand %p304, %p305
      %p307 = pneg %p306
      // Predicated region
      $region9: #{tpu_custom_call.1} parent=5 // pred_check
        _
      $region10: #{tpu_custom_call.1} parent=5 // pred_check_branch
        %309 = sbr.rel (%p306) target = $region12
      $region11: #{tpu_custom_call.1} parent=5 // pred_region
        %s310 = ssub.s32 %s20, 1
        // Predicated region
        $region13: #{tpu_custom_call.1} parent=11 // pred_check
          %p311 = pneg %p81
        $region14: #{tpu_custom_call.1} parent=11 // pred_check_branch
          %313 = sbr.rel (%p311) target = $region16
        $region15: #{tpu_custom_call.1} parent=11 // pred_region
          _
        $region16: #{tpu_custom_call.1} parent=11 // pred_fallthru
          _
        // Predicated region
        $region17: #{tpu_custom_call.1} parent=11 // pred_check
          %p314 = pneg %p102
        $region18: #{tpu_custom_call.1} parent=11 // pred_check_branch
          %316 = sbr.rel (%p314) target = $region20
        $region19: #{tpu_custom_call.1} parent=11 // pred_region
          _
        $region20: #{tpu_custom_call.1} parent=11 // pred_fallthru
          _
        // Predicated region
        $region21: #{tpu_custom_call.1} parent=11 // pred_check
          %p317 = pneg %p123
        $region22: #{tpu_custom_call.1} parent=11 // pred_check_branch
          %319 = sbr.rel (%p317) target = $region24
        $region23: #{tpu_custom_call.1} parent=11 // pred_region
          _
        $region24: #{tpu_custom_call.1} parent=11 // pred_fallthru
          _
        // Predicated region
        $region25: #{tpu_custom_call.1} parent=11 // pred_check
          %p320 = pneg %p144
        $region26: #{tpu_custom_call.1} parent=11 // pred_check_branch
          %322 = sbr.rel (%p320) target = $region28
        $region27: #{tpu_custom_call.1} parent=11 // pred_region
          _
        $region28: #{tpu_custom_call.1} parent=11 // pred_fallthru
          _
        // Predicated region
        $region29: #{tpu_custom_call.1} parent=11 // pred_check
          %p323 = pneg %p165
        $region30: #{tpu_custom_call.1} parent=11 // pred_check_branch
          %325 = sbr.rel (%p323) target = $region32
        $region31: #{tpu_custom_call.1} parent=11 // pred_region
          _
        $region32: #{tpu_custom_call.1} parent=11 // pred_fallthru
          _
        // Predicated region
        $region33: #{tpu_custom_call.1} parent=11 // pred_check
          %p326 = pneg %p186
        $region34: #{tpu_custom_call.1} parent=11 // pred_check_branch
          %328 = sbr.rel (%p326) target = $region36
        $region35: #{tpu_custom_call.1} parent=11 // pred_region
          _
        $region36: #{tpu_custom_call.1} parent=11 // pred_fallthru
          _
        // Predicated region
        $region37: #{tpu_custom_call.1} parent=11 // pred_check
          %p329 = pneg %p207
        $region38: #{tpu_custom_call.1} parent=11 // pred_check_branch
          %331 = sbr.rel (%p329) target = $region40
        $region39: #{tpu_custom_call.1} parent=11 // pred_region
          _
        $region40: #{tpu_custom_call.1} parent=11 // pred_fallthru
          _
        // Predicated region
        $region41: #{tpu_custom_call.1} parent=11 // pred_check
          %p332 = pneg %p228
        $region42: #{tpu_custom_call.1} parent=11 // pred_check_branch
          %334 = sbr.rel (%p332) target = $region44
        $region43: #{tpu_custom_call.1} parent=11 // pred_region
          _
        $region44: #{tpu_custom_call.1} parent=11 // pred_fallthru
          _
        // Predicated region
        $region45: #{tpu_custom_call.1} parent=11 // pred_check
          %p335 = pneg %p249
        $region46: #{tpu_custom_call.1} parent=11 // pred_check_branch
          %337 = sbr.rel (%p335) target = $region48
        $region47: #{tpu_custom_call.1} parent=11 // pred_region
          _
        $region48: #{tpu_custom_call.1} parent=11 // pred_fallthru
          _
        // Predicated region
        $region49: #{tpu_custom_call.1} parent=11 // pred_check
          %p338 = pneg %p270
        $region50: #{tpu_custom_call.1} parent=11 // pred_check_branch
          %340 = sbr.rel (%p338) target = $region52
        $region51: #{tpu_custom_call.1} parent=11 // pred_region
          _
        $region52: #{tpu_custom_call.1} parent=11 // pred_fallthru
          _
      $region12: #{tpu_custom_call.1} parent=5 // pred_fallthru
        _
      %p341 = scmp.lt.s32.totalorder %s20, 2
      // Predicated region
      $region53: #{tpu_custom_call.1} parent=5 // pred_check
        %p342 = pneg %p341
      $region54: #{tpu_custom_call.1} parent=5 // pred_check_branch
        %344 = sbr.rel (%p342) target = $region56
      $region55: #{tpu_custom_call.1} parent=5 // pred_region
        // Predicated region
        $region57: #{tpu_custom_call.1} parent=55 // pred_check
          %p345 = pneg %p54
        $region58: #{tpu_custom_call.1} parent=55 // pred_check_branch
          %347 = sbr.rel (%p345) target = $region60
        $region59: #{tpu_custom_call.1} parent=55 // pred_region
          %s348 = smul.u32 8, %s28
          %p349 = scmp.lt.s32.totalorder %s27, 1
          %s350 = scalar_select %p349, %s27, 1
          %p351 = scmp.lt.s32.totalorder %s348, 7
          %s352 = scalar_select %p351, %s348, 7
          %s353 = smul.addr %s350, 8
          %s354 = sadd.s32 %s352, %s353
          %s355 = smul.addr %s354, 4
          %s356 = scalar_lea.vmem %s0, %s355
          %s357 = smul.u32 8, %s28
        $region60: #{tpu_custom_call.1} parent=55 // pred_fallthru
          _
      $region56: #{tpu_custom_call.1} parent=5 // pred_fallthru
        _
      %p358 = scmp.le.s32.totalorder 1, %s20
      %p359 = scmp.lt.s32.totalorder %s20, 3
      %p360 = pnand %p358, %p359
      %p361 = pneg %p360
      // Predicated region
      $region61: #{tpu_custom_call.1} parent=5 // pred_check
        _
      $region62: #{tpu_custom_call.1} parent=5 // pred_check_branch
        %363 = sbr.rel (%p360) target = $region64
      $region63: #{tpu_custom_call.1} parent=5 // pred_region
        %s364 = ssub.s32 %s20, 1
        %s365 = smul.u32 8, %s30
        %p366 = scmp.lt.s32.totalorder %s29, 1
        %s367 = scalar_select %p366, %s29, 1
        %p368 = scmp.lt.s32.totalorder %s365, 7
        %s369 = scalar_select %p368, %s365, 7
        %s370 = smul.addr %s367, 8
        %s371 = sadd.s32 %s369, %s370
        %s372 = smul.addr %s371, 4
        %s373 = scalar_lea.vmem %s0, %s372
        %p374 = pneg %p60
        %p375 = pneg %p57
        %p376 = pneg %p81
        %p377 = pneg %p78
        %p378 = pneg %p102
        %p379 = pneg %p99
        %p380 = pneg %p123
        %p381 = pneg %p120
        %p382 = pneg %p144
        %p383 = pneg %p141
        %p384 = pneg %p165
        %p385 = pneg %p162
        %p386 = pneg %p186
        %p387 = pneg %p183
        %p388 = pneg %p207
        %p389 = pneg %p204
        %p390 = pneg %p228
        %p391 = pneg %p225
        %p392 = pneg %p249
        %p393 = pneg %p246
        %p394 = pneg %p270
        %p395 = pneg %p267
        %p396 = pneg %p296
        %p397 = pneg %p293
        %s398 = sand.u32 %s283, 1
        %s399 = scalar_lea.sflag [#allocation4], %s398
        %s400 = sand.u32 %s283, 1
        %s401 = smul.addr %s400, 8
        %s402 = scalar_lea.vmem [#allocation3], %s401
        %s403 = smul.u32 8, %s30
        %p404 = scmp.lt.s32.totalorder %s29, 1
        %s405 = scalar_select %p404, %s29, 1
        %p406 = scmp.lt.s32.totalorder %s403, 7
        %s407 = scalar_select %p406, %s403, 7
        %s408 = smul.addr %s405, 8
        %s409 = sadd.s32 %s407, %s408
        %s410 = smul.addr %s409, 4
        %s411 = scalar_lea.vmem %s0, %s410
        %s412 = smul.u32 8, %s30
        %p414 = scmp.eq.s32.totalorder %s30, 0
        // Predicated region
        $region65: #{tpu_custom_call.1} parent=63 // pred_check
          %p415 = pneg %p414
        $region66: #{tpu_custom_call.1} parent=63 // pred_check_branch
          %417 = sbr.rel (%p415) target = $region68
        $region67: #{tpu_custom_call.1} parent=63 // pred_region
          %418 = vst [vmem:[#allocation2] sm:$0xff] 0.0
        $region68: #{tpu_custom_call.1} parent=63 // pred_fallthru
          _
        %v419 = vld [vmem:[%s411] sm:$0xf]
        %v420 = vld [vmem:[%s411 + $0x4] sm:$0xf]
        %v421 = vld [vmem:[%s411 + $0x8] sm:$0xf]
        %v422 = vld [vmem:[%s411 + $0xc] sm:$0xf]
        %v423 = vld [vmem:[%s411 + $0x10] sm:$0xf]
        %v424 = vld [vmem:[%s411 + $0x14] sm:$0xf]
        %v425 = vld [vmem:[%s411 + $0x18] sm:$0xf]
        %v426 = vld [vmem:[%s411 + $0x1c] sm:$0xf]
        %v427 = vld [vmem:[%s1] sm:$0xf]
        %v428 = vld [vmem:[%s1 + $0x4] sm:$0xf]
        %v429 = vld [vmem:[%s1 + $0x8] sm:$0xf]
        %v430 = vld [vmem:[%s1 + $0xc] sm:$0xf]
        %v431 = vld [vmem:[%s2] sm:$0x1]
        %v433 = vlaneseq
        %v434 = vshrl.u32 %v433, 7
        %v435 = vsub.s32 0, %v434
        %v436 = vrot.slane %v431, %v435
        %v446 = vunpack.c.l.b16 %v419
        %v447 = vunpack.c.l.b16 %v420
        %v448 = vunpack.c.l.b16 %v421
        %v449 = vunpack.c.l.b16 %v422
        %v450 = vunpack.c.l.b16 %v423
        %v451 = vunpack.c.l.b16 %v424
        %v452 = vunpack.c.l.b16 %v425
        %v453 = vunpack.c.l.b16 %v426
        %v454 = vpack.c.b16 %v447, %v446
        %v455 = vpack.c.b16 %v449, %v448
        %v456 = vpack.c.b16 %v451, %v450
        %v457 = vpack.c.b16 %v453, %v452
        %v462 = vunpack.c.l.b16 %v427
        %v463 = vunpack.c.l.b16 %v428
        %v464 = vunpack.c.l.b16 %v429
        %v465 = vunpack.c.l.b16 %v430
        %v466 = vpack.c.b16 %v463, %v462
        %v467 = vpack.c.b16 %v465, %v464
        %vm470 = vcmask 261120
        %v472 = vsel %vm470, %v454, 0
        %v475 = vsel %vm470, %v455, 0
        %v478 = vsel %vm470, %v456, 0
        %v481 = vsel %vm470, %v457, 0
        %483 = vmatprep.subr.bf16.mxu0 0
        %484 = vmatpush1.bf16.msra.mxu0 %v466
        %485 = vmatprep.subr.bf16.mxu0 0
        %486 = vmatpush1.bf16.msra.mxu0 %v467
        %487 = vmatprep.subr.bf16.mxu0 0
        %488 = vmatpush1.bf16.msra.mxu0 0
        %489 = vmatprep.subr.bf16.mxu0 0
        %490 = vmatpush1.bf16.msra.mxu0 0
        %491 = vmatprep.subr.bf16.mxu0 0
        %492 = vmatpush1.bf16.msra.mxu0 0
        %493 = vmatprep.subr.bf16.mxu0 0
        %494 = vmatpush1.bf16.msra.mxu0 0
        %495 = vmatprep.subr.bf16.mxu0 0
        %496 = vmatpush1.bf16.msra.mxu0 0
        %497 = vmatprep.subr.bf16.mxu0 0
        %498 = vmatpush1.bf16.msra.mxu0 0
        %499 = vmatprep.subr.bf16.mxu0 0
        %500 = vmatpush1.bf16.msra.mxu0 0
        %501 = vmatprep.subr.bf16.mxu0 0
        %502 = vmatpush1.bf16.msra.mxu0 0
        %503 = vmatprep.subr.bf16.mxu0 0
        %504 = vmatpush1.bf16.msra.mxu0 0
        %505 = vmatprep.subr.bf16.mxu0 0
        %506 = vmatpush1.bf16.msra.mxu0 0
        %507 = vmatprep.subr.bf16.mxu0 0
        %508 = vmatpush1.bf16.msra.mxu0 0
        %509 = vmatprep.subr.bf16.mxu0 0
        %510 = vmatpush1.bf16.msra.mxu0 0
        %511 = vmatprep.subr.bf16.mxu0 0
        %512 = vmatpush1.bf16.msra.mxu0 0
        %513 = vmatprep.subr.bf16.mxu0 0
        %514 = vmatpush1.bf16.msra.mxu0 0
        %515 = vmatprep.mubr.bf16.mxu0 0
        %516 = vmatmul.mubr.bf16.gmra.mrb[0].mxu0 %v472
        %v517 = vpop.f32.mrb[0].mxu0
        %v518 = vadd.f32 %v436, %v517
        %v519 = vpop.f32.mrb[0].mxu0
        %v520 = vpop.f32.mrb[0].mxu0
        %v521 = vadd.f32 %v436, %v520
        %v522 = vpop.f32.mrb[0].mxu0
        %523 = vmatprep.mubr.bf16.mxu0 0
        %524 = vmatmul.mubr.bf16.gmra.mrb[0].mxu0 %v475
        %v525 = vpop.f32.mrb[0].mxu0
        %v526 = vadd.f32 %v436, %v525
        %v527 = vpop.f32.mrb[0].mxu0
        %v528 = vpop.f32.mrb[0].mxu0
        %v529 = vadd.f32 %v436, %v528
        %v530 = vpop.f32.mrb[0].mxu0
        %531 = vmatprep.mubr.bf16.mxu0 0
        %532 = vmatmul.mubr.bf16.gmra.mrb[0].mxu0 %v478
        %v533 = vpop.f32.mrb[0].mxu0
        %v534 = vadd.f32 %v436, %v533
        %v535 = vpop.f32.mrb[0].mxu0
        %v536 = vpop.f32.mrb[0].mxu0
        %v537 = vadd.f32 %v436, %v536
        %v538 = vpop.f32.mrb[0].mxu0
        %539 = vmatprep.mubr.bf16.mxu0 0
        %540 = vmatmul.mubr.bf16.gmra.mrb[0].mxu0 %v481
        %v541 = vpop.f32.mrb[0].mxu0
        %v542 = vadd.f32 %v436, %v541
        %v543 = vpop.f32.mrb[0].mxu0
        %v544 = vpop.f32.mrb[0].mxu0
        %v545 = vadd.f32 %v436, %v544
        %v546 = vpop.f32.mrb[0].mxu0
        %547 = vdwg.mxu0
        %v548 = vsub.f32 0.0, %v518
        %v549 = vsub.f32 0.0, %v521
        %v550 = vsub.f32 0.0, %v526
        %v551 = vsub.f32 0.0, %v529
        %v552 = vsub.f32 0.0, %v534
        %v553 = vsub.f32 0.0, %v537
        %v554 = vsub.f32 0.0, %v542
        %v555 = vsub.f32 0.0, %v545
        %v556 = vmul.f32 %v548, 1.442695
        %v557 = vpow.pop %v556
        %v558 = vmul.f32 %v549, 1.442695
        %v559 = vpow.pop %v558
        %v560 = vmul.f32 %v550, 1.442695
        %v561 = vpow.pop %v560
        %v562 = vmul.f32 %v551, 1.442695
        %v563 = vpow.pop %v562
        %v564 = vmul.f32 %v552, 1.442695
        %v565 = vpow.pop %v564
        %v566 = vmul.f32 %v553, 1.442695
        %v567 = vpow.pop %v566
        %v568 = vmul.f32 %v554, 1.442695
        %v569 = vpow.pop %v568
        %v570 = vmul.f32 %v555, 1.442695
        %v571 = vpow.pop %v570
        %v572 = vadd.f32 %v557, 1.0
        %v573 = vadd.f32 %v559, 1.0
        %v574 = vadd.f32 %v561, 1.0
        %v575 = vadd.f32 %v563, 1.0
        %v576 = vadd.f32 %v565, 1.0
        %v577 = vadd.f32 %v567, 1.0
        %v578 = vadd.f32 %v569, 1.0
        %v579 = vadd.f32 %v571, 1.0
        %v580 = vrcp.pop %v572
        %v581 = vrcp.pop %v573
        %v582 = vrcp.pop %v574
        %v583 = vrcp.pop %v575
        %v584 = vrcp.pop %v576
        %v585 = vrcp.pop %v577
        %v586 = vrcp.pop %v578
        %v587 = vrcp.pop %v579
        %v588 = vmul.f32 %v518, %v580
        %v589 = vmul.f32 %v521, %v581
        %v590 = vmul.f32 %v526, %v582
        %v591 = vmul.f32 %v529, %v583
        %v592 = vmul.f32 %v534, %v584
        %v593 = vmul.f32 %v537, %v585
        %v594 = vmul.f32 %v542, %v586
        %v595 = vmul.f32 %v545, %v587
        %v596 = vpack.c.bf16 %v589, %v588
        %v597 = vpack.c.bf16 %v591, %v590
        %v598 = vpack.c.bf16 %v593, %v592
        %v599 = vpack.c.bf16 %v595, %v594
        %v600 = vld [vmem:[%s3] sm:$0xf]
        %v601 = vld [vmem:[%s3 + $0x4] sm:$0xf]
        %v602 = vld [vmem:[%s3 + $0x8] sm:$0xf]
        %v603 = vld [vmem:[%s3 + $0xc] sm:$0xf]
        %v604 = vld [vmem:[%s4] sm:$0x1]
        %v606 = vlaneseq
        %v607 = vshrl.u32 %v606, 7
        %v608 = vsub.s32 0, %v607
        %v609 = vrot.slane %v604, %v608
        %v615 = vunpack.c.l.b16 %v600
        %v616 = vunpack.c.l.b16 %v601
        %v617 = vunpack.c.l.b16 %v602
        %v618 = vunpack.c.l.b16 %v603
        %v619 = vpack.c.b16 %v616, %v615
        %v620 = vpack.c.b16 %v618, %v617
        %v624 = vsel %vm470, %v596, 0
        %v627 = vsel %vm470, %v597, 0
        %v630 = vsel %vm470, %v598, 0
        %v633 = vsel %vm470, %v599, 0
        %635 = vmatprep.subr.bf16.mxu0 0
        %636 = vmatpush1.bf16.msra.mxu0 %v619
        %637 = vmatprep.subr.bf16.mxu0 0
        %638 = vmatpush1.bf16.msra.mxu0 %v620
        %639 = vmatprep.subr.bf16.mxu0 0
        %640 = vmatpush1.bf16.msra.mxu0 0
        %641 = vmatprep.subr.bf16.mxu0 0
        %642 = vmatpush1.bf16.msra.mxu0 0
        %643 = vmatprep.subr.bf16.mxu0 0
        %644 = vmatpush1.bf16.msra.mxu0 0
        %645 = vmatprep.subr.bf16.mxu0 0
        %646 = vmatpush1.bf16.msra.mxu0 0
        %647 = vmatprep.subr.bf16.mxu0 0
        %648 = vmatpush1.bf16.msra.mxu0 0
        %649 = vmatprep.subr.bf16.mxu0 0
        %650 = vmatpush1.bf16.msra.mxu0 0
        %651 = vmatprep.subr.bf16.mxu0 0
        %652 = vmatpush1.bf16.msra.mxu0 0
        %653 = vmatprep.subr.bf16.mxu0 0
        %654 = vmatpush1.bf16.msra.mxu0 0
        %655 = vmatprep.subr.bf16.mxu0 0
        %656 = vmatpush1.bf16.msra.mxu0 0
        %657 = vmatprep.subr.bf16.mxu0 0
        %658 = vmatpush1.bf16.msra.mxu0 0
        %659 = vmatprep.subr.bf16.mxu0 0
        %660 = vmatpush1.bf16.msra.mxu0 0
        %661 = vmatprep.subr.bf16.mxu0 0
        %662 = vmatpush1.bf16.msra.mxu0 0
        %663 = vmatprep.subr.bf16.mxu0 0
        %664 = vmatpush1.bf16.msra.mxu0 0
        %665 = vmatprep.subr.bf16.mxu0 0
        %666 = vmatpush1.bf16.msra.mxu0 0
        %667 = vmatprep.mubr.bf16.mxu0 0
        %668 = vmatmul.mubr.bf16.gmra.mrb[0].mxu0 %v624
        %v669 = vpop.f32.mrb[0].mxu0
        %v670 = vadd.f32 %v609, %v669
        %v671 = vpop.f32.mrb[0].mxu0
        %v672 = vpop.f32.mrb[0].mxu0
        %v673 = vadd.f32 %v609, %v672
        %v674 = vpop.f32.mrb[0].mxu0
        %675 = vmatprep.mubr.bf16.mxu0 0
        %676 = vmatmul.mubr.bf16.gmra.mrb[0].mxu0 %v627
        %v677 = vpop.f32.mrb[0].mxu0
        %v678 = vadd.f32 %v609, %v677
        %v679 = vpop.f32.mrb[0].mxu0
        %v680 = vpop.f32.mrb[0].mxu0
        %v681 = vadd.f32 %v609, %v680
        %v682 = vpop.f32.mrb[0].mxu0
        %683 = vmatprep.mubr.bf16.mxu0 0
        %684 = vmatmul.mubr.bf16.gmra.mrb[0].mxu0 %v630
        %v685 = vpop.f32.mrb[0].mxu0
        %v686 = vadd.f32 %v609, %v685
        %v687 = vpop.f32.mrb[0].mxu0
        %v688 = vpop.f32.mrb[0].mxu0
        %v689 = vadd.f32 %v609, %v688
        %v690 = vpop.f32.mrb[0].mxu0
        %691 = vmatprep.mubr.bf16.mxu0 0
        %692 = vmatmul.mubr.bf16.gmra.mrb[0].mxu0 %v633
        %v693 = vpop.f32.mrb[0].mxu0
        %v694 = vadd.f32 %v609, %v693
        %v695 = vpop.f32.mrb[0].mxu0
        %v696 = vpop.f32.mrb[0].mxu0
        %v697 = vadd.f32 %v609, %v696
        %v698 = vpop.f32.mrb[0].mxu0
        %699 = vdwg.mxu0
        %v700 = vsub.f32 0.0, %v670
        %v701 = vsub.f32 0.0, %v673
        %v702 = vsub.f32 0.0, %v678
        %v703 = vsub.f32 0.0, %v681
        %v704 = vsub.f32 0.0, %v686
        %v705 = vsub.f32 0.0, %v689
        %v706 = vsub.f32 0.0, %v694
        %v707 = vsub.f32 0.0, %v697
        %v708 = vmul.f32 %v700, 1.442695
        %v709 = vpow.pop %v708
        %v710 = vmul.f32 %v701, 1.442695
        %v711 = vpow.pop %v710
        %v712 = vmul.f32 %v702, 1.442695
        %v713 = vpow.pop %v712
        %v714 = vmul.f32 %v703, 1.442695
        %v715 = vpow.pop %v714
        %v716 = vmul.f32 %v704, 1.442695
        %v717 = vpow.pop %v716
        %v718 = vmul.f32 %v705, 1.442695
        %v719 = vpow.pop %v718
        %v720 = vmul.f32 %v706, 1.442695
        %v721 = vpow.pop %v720
        %v722 = vmul.f32 %v707, 1.442695
        %v723 = vpow.pop %v722
        %v724 = vadd.f32 %v709, 1.0
        %v725 = vadd.f32 %v711, 1.0
        %v726 = vadd.f32 %v713, 1.0
        %v727 = vadd.f32 %v715, 1.0
        %v728 = vadd.f32 %v717, 1.0
        %v729 = vadd.f32 %v719, 1.0
        %v730 = vadd.f32 %v721, 1.0
        %v731 = vadd.f32 %v723, 1.0
        %v732 = vrcp.pop %v724
        %v733 = vrcp.pop %v725
        %v734 = vrcp.pop %v726
        %v735 = vrcp.pop %v727
        %v736 = vrcp.pop %v728
        %v737 = vrcp.pop %v729
        %v738 = vrcp.pop %v730
        %v739 = vrcp.pop %v731
        %v740 = vmul.f32 %v670, %v732
        %v741 = vmul.f32 %v673, %v733
        %v742 = vmul.f32 %v678, %v734
        %v743 = vmul.f32 %v681, %v735
        %v744 = vmul.f32 %v686, %v736
        %v745 = vmul.f32 %v689, %v737
        %v746 = vmul.f32 %v694, %v738
        %v747 = vmul.f32 %v697, %v739
        %s748 = smul.u32 %s30, 64
        %v749 = vlaneseq
        %v750 = vshrl.u32 %v749, 7
        %v751 = vadd.s32 %v750, 8
        %v752 = vadd.s32 %v750, 16
        %v753 = vadd.s32 %v750, 24
        %v754 = vadd.s32 %v750, 32
        %v755 = vadd.s32 %v750, 40
        %v756 = vadd.s32 %v750, 48
        %v757 = vadd.s32 %v750, 56
        %v758 = vstv %s748
        %v759 = vadd.s32 %v758, %v750
        %v760 = vadd.s32 %v758, %v751
        %v761 = vadd.s32 %v758, %v752
        %v762 = vadd.s32 %v758, %v753
        %v763 = vadd.s32 %v758, %v754
        %v764 = vadd.s32 %v758, %v755
        %v765 = vadd.s32 %v758, %v756
        %v766 = vadd.s32 %v758, %v757
        %vm767 = vcmp.lt.s32.totalorder %v759, 64
        %vm768 = vcmp.lt.s32.totalorder %v760, 64
        %vm769 = vcmp.lt.s32.totalorder %v761, 64
        %vm770 = vcmp.lt.s32.totalorder %v762, 64
        %vm771 = vcmp.lt.s32.totalorder %v763, 64
        %vm772 = vcmp.lt.s32.totalorder %v764, 64
        %vm773 = vcmp.lt.s32.totalorder %v765, 64
        %vm774 = vcmp.lt.s32.totalorder %v766, 64
        %v775 = vsel %vm767, 1, 0
        %v776 = vsel %vm768, 1, 0
        %v777 = vsel %vm769, 1, 0
        %v778 = vsel %vm770, 1, 0
        %v779 = vsel %vm771, 1, 0
        %v780 = vsel %vm772, 1, 0
        %v781 = vsel %vm773, 1, 0
        %v782 = vsel %vm774, 1, 0
        %vm783 = vcmp.eq.s32.totalorder %v775, 1
        %vm784 = vcmp.eq.s32.totalorder %v776, 1
        %vm785 = vcmp.eq.s32.totalorder %v777, 1
        %vm786 = vcmp.eq.s32.totalorder %v778, 1
        %vm787 = vcmp.eq.s32.totalorder %v779, 1
        %vm788 = vcmp.eq.s32.totalorder %v780, 1
        %vm789 = vcmp.eq.s32.totalorder %v781, 1
        %vm790 = vcmp.eq.s32.totalorder %v782, 1
        %v791 = vsel %vm783, %v740, 0.0
        %v792 = vsel %vm784, %v741, 0.0
        %v793 = vsel %vm785, %v742, 0.0
        %v794 = vsel %vm786, %v743, 0.0
        %v795 = vsel %vm787, %v744, 0.0
        %v796 = vsel %vm788, %v745, 0.0
        %v797 = vsel %vm789, %v746, 0.0
        %v798 = vsel %vm790, %v747, 0.0
        %v799 = vld [vmem:[#allocation2] sm:$0xff]
        %v800 = vadd.f32 %v791, %v792
        %v801 = vadd.f32 %v800, %v793
        %v802 = vadd.f32 %v801, %v794
        %v803 = vadd.f32 %v802, %v795
        %v804 = vadd.f32 %v803, %v796
        %v805 = vadd.f32 %v804, %v797
        %v806 = vadd.f32 %v805, %v798
        %v807 = vrot.slane %v806, 4
        %v808 = vadd.f32 %v806, %v807
        %v809 = vrot.slane %v808, 2
        %v810 = vadd.f32 %v808, %v809
        %v811 = vrot.slane %v810, 1
        %v812 = vadd.f32 %v810, %v811
        %v813 = vadd.f32 %v799, %v812
        %814 = vst [vmem:[#allocation2] sm:$0xff] %v813
        // Predicated region
        $region69: #{tpu_custom_call.1} parent=63 // pred_check
          %p815 = pneg %p414
        $region70: #{tpu_custom_call.1} parent=63 // pred_check_branch
          %817 = sbr.rel (%p815) target = $region72
        $region71: #{tpu_custom_call.1} parent=63 // pred_region
          %v818 = vld [vmem:[#allocation2] sm:$0xff]
          %v819 = vmul.f32 %v818, 0.015625
          %v820 = vld [vmem:[%s5] sm:$0xff]
          %v821 = vld [vmem:[%s5 + $0x8] sm:$0xff]
          %v822 = vld [vmem:[%s5 + $0x10] sm:$0xff]
          %v823 = vld [vmem:[%s5 + $0x18] sm:$0xff]
          %v824 = vld [vmem:[%s5 + $0x20] sm:$0xff]
          %v825 = vld [vmem:[%s5 + $0x28] sm:$0xff]
          %v826 = vld [vmem:[%s5 + $0x30] sm:$0xff]
          %v827 = vld [vmem:[%s5 + $0x38] sm:$0xff]
          %v828 = vld [vmem:[%s5 + $0x40] sm:$0xff]
          %v829 = vld [vmem:[%s5 + $0x48] sm:$0xff]
          %v830 = vld [vmem:[%s5 + $0x50] sm:$0xff]
          %v831 = vld [vmem:[%s5 + $0x58] sm:$0xff]
          %v832 = vld [vmem:[%s5 + $0x60] sm:$0xff]
          %v833 = vld [vmem:[%s5 + $0x68] sm:$0xff]
          %v834 = vld [vmem:[%s5 + $0x70] sm:$0xff]
          %v835 = vld [vmem:[%s5 + $0x78] sm:$0xff]
          %v836 = vld [vmem:[%s6] sm:$0x1]
          %v838 = vlaneseq
          %v839 = vshrl.u32 %v838, 7
          %v840 = vsub.s32 0, %v839
          %v841 = vrot.slane %v836, %v840
          %843 = vmatprep.subr.mxu0 0.0
          %844 = vmatpush1.msra.mxu0 %v820
          %845 = vmatprep.subr.mxu0 0.0
          %846 = vmatpush1.msra.mxu0 %v821
          %847 = vmatprep.subr.mxu0 0.0
          %848 = vmatpush1.msra.mxu0 %v822
          %849 = vmatprep.subr.mxu0 0.0
          %850 = vmatpush1.msra.mxu0 %v823
          %851 = vmatprep.subr.mxu0 0.0
          %852 = vmatpush1.msra.mxu0 %v824
          %853 = vmatprep.subr.mxu0 0.0
          %854 = vmatpush1.msra.mxu0 %v825
          %855 = vmatprep.subr.mxu0 0.0
          %856 = vmatpush1.msra.mxu0 %v826
          %857 = vmatprep.subr.mxu0 0.0
          %858 = vmatpush1.msra.mxu0 %v827
          %859 = vmatprep.subr.mxu0 0.0
          %860 = vmatpush1.msra.mxu0 %v828
          %861 = vmatprep.subr.mxu0 0.0
          %862 = vmatpush1.msra.mxu0 %v829
          %863 = vmatprep.subr.mxu0 0.0
          %864 = vmatpush1.msra.mxu0 %v830
          %865 = vmatprep.subr.mxu0 0.0
          %866 = vmatpush1.msra.mxu0 %v831
          %867 = vmatprep.subr.mxu0 0.0
          %868 = vmatpush1.msra.mxu0 %v832
          %869 = vmatprep.subr.mxu0 0.0
          %870 = vmatpush1.msra.mxu0 %v833
          %871 = vmatprep.subr.mxu0 0.0
          %872 = vmatpush1.msra.mxu0 %v834
          %873 = vmatprep.subr.mxu0 0.0
          %874 = vmatpush1.msra.mxu0 %v835
          %875 = vmatprep.subr.mxu0 0.0
          %876 = vmatpush1.msra.mxu0 0.0
          %877 = vmatprep.subr.mxu0 0.0
          %878 = vmatpush1.msra.mxu0 0.0
          %879 = vmatprep.subr.mxu0 0.0
          %880 = vmatpush1.msra.mxu0 0.0
          %881 = vmatprep.subr.mxu0 0.0
          %882 = vmatpush1.msra.mxu0 0.0
          %883 = vmatprep.subr.mxu0 0.0
          %884 = vmatpush1.msra.mxu0 0.0
          %885 = vmatprep.subr.mxu0 0.0
          %886 = vmatpush1.msra.mxu0 0.0
          %887 = vmatprep.subr.mxu0 0.0
          %888 = vmatpush1.msra.mxu0 0.0
          %889 = vmatprep.subr.mxu0 0.0
          %890 = vmatpush1.msra.mxu0 0.0
          %891 = vmatprep.subr.mxu0 0.0
          %892 = vmatpush1.msra.mxu0 0.0
          %893 = vmatprep.subr.mxu0 0.0
          %894 = vmatpush1.msra.mxu0 0.0
          %895 = vmatprep.subr.mxu0 0.0
          %896 = vmatpush1.msra.mxu0 0.0
          %897 = vmatprep.subr.mxu0 0.0
          %898 = vmatpush1.msra.mxu0 0.0
          %899 = vmatprep.subr.mxu0 0.0
          %900 = vmatpush1.msra.mxu0 0.0
          %901 = vmatprep.subr.mxu0 0.0
          %902 = vmatpush1.msra.mxu0 0.0
          %903 = vmatprep.subr.mxu0 0.0
          %904 = vmatpush1.msra.mxu0 0.0
          %905 = vmatprep.subr.mxu0 0.0
          %906 = vmatpush1.msra.mxu0 0.0
          %907 = vmatprep.mubr.f32.mxu0 0.0
          %908 = vmatmul.mubr.f32.gmra.mrb[0].mxu0 %v819
          %v909 = vpop.f32.mrb[0].mxu0
          %v910 = vadd.f32 %v841, %v909
          %v911 = vpop.f32.mrb[0].mxu0
          %912 = vdwg.mxu0
          %v913 = vmax.f32 %v910, 0.0
          %v914 = vld [vmem:[%s7] sm:$0xff]
          %v915 = vld [vmem:[%s7 + $0x8] sm:$0xff]
          %v916 = vld [vmem:[%s7 + $0x10] sm:$0xff]
          %v917 = vld [vmem:[%s7 + $0x18] sm:$0xff]
          %v918 = vld [vmem:[%s7 + $0x20] sm:$0xff]
          %v919 = vld [vmem:[%s7 + $0x28] sm:$0xff]
          %v920 = vld [vmem:[%s7 + $0x30] sm:$0xff]
          %v921 = vld [vmem:[%s7 + $0x38] sm:$0xff]
          %v922 = vld [vmem:[%s8] sm:$0x1]
          %v924 = vlaneseq
          %v925 = vshrl.u32 %v924, 7
          %v926 = vsub.s32 0, %v925
          %v927 = vrot.slane %v922, %v926
          %vm929 = vcmask 523264
          %v931 = vsel %vm929, %v913, 0
          %933 = vmatprep.subr.mxu0 0.0
          %934 = vmatpush1.msra.mxu0 %v914
          %935 = vmatprep.subr.mxu0 0.0
          %936 = vmatpush1.msra.mxu0 %v915
          %937 = vmatprep.subr.mxu0 0.0
          %938 = vmatpush1.msra.mxu0 %v916
          %939 = vmatprep.subr.mxu0 0.0
          %940 = vmatpush1.msra.mxu0 %v917
          %941 = vmatprep.subr.mxu0 0.0
          %942 = vmatpush1.msra.mxu0 %v918
          %943 = vmatprep.subr.mxu0 0.0
          %944 = vmatpush1.msra.mxu0 %v919
          %945 = vmatprep.subr.mxu0 0.0
          %946 = vmatpush1.msra.mxu0 %v920
          %947 = vmatprep.subr.mxu0 0.0
          %948 = vmatpush1.msra.mxu0 %v921
          %949 = vmatprep.subr.mxu0 0.0
          %950 = vmatpush1.msra.mxu0 0.0
          %951 = vmatprep.subr.mxu0 0.0
          %952 = vmatpush1.msra.mxu0 0.0
          %953 = vmatprep.subr.mxu0 0.0
          %954 = vmatpush1.msra.mxu0 0.0
          %955 = vmatprep.subr.mxu0 0.0
          %956 = vmatpush1.msra.mxu0 0.0
          %957 = vmatprep.subr.mxu0 0.0
          %958 = vmatpush1.msra.mxu0 0.0
          %959 = vmatprep.subr.mxu0 0.0
          %960 = vmatpush1.msra.mxu0 0.0
          %961 = vmatprep.subr.mxu0 0.0
          %962 = vmatpush1.msra.mxu0 0.0
          %963 = vmatprep.subr.mxu0 0.0
          %964 = vmatpush1.msra.mxu0 0.0
          %965 = vmatprep.subr.mxu0 0.0
          %966 = vmatpush1.msra.mxu0 0.0
          %967 = vmatprep.subr.mxu0 0.0
          %968 = vmatpush1.msra.mxu0 0.0
          %969 = vmatprep.subr.mxu0 0.0
          %970 = vmatpush1.msra.mxu0 0.0
          %971 = vmatprep.subr.mxu0 0.0
          %972 = vmatpush1.msra.mxu0 0.0
          %973 = vmatprep.subr.mxu0 0.0
          %974 = vmatpush1.msra.mxu0 0.0
          %975 = vmatprep.subr.mxu0 0.0
          %976 = vmatpush1.msra.mxu0 0.0
          %977 = vmatprep.subr.mxu0 0.0
          %978 = vmatpush1.msra.mxu0 0.0
          %979 = vmatprep.subr.mxu0 0.0
          %980 = vmatpush1.msra.mxu0 0.0
          %981 = vmatprep.subr.mxu0 0.0
          %982 = vmatpush1.msra.mxu0 0.0
          %983 = vmatprep.subr.mxu0 0.0
          %984 = vmatpush1.msra.mxu0 0.0
          %985 = vmatprep.subr.mxu0 0.0
          %986 = vmatpush1.msra.mxu0 0.0
          %987 = vmatprep.subr.mxu0 0.0
          %988 = vmatpush1.msra.mxu0 0.0
          %989 = vmatprep.subr.mxu0 0.0
          %990 = vmatpush1.msra.mxu0 0.0
          %991 = vmatprep.subr.mxu0 0.0
          %992 = vmatpush1.msra.mxu0 0.0
          %993 = vmatprep.subr.mxu0 0.0
          %994 = vmatpush1.msra.mxu0 0.0
          %995 = vmatprep.subr.mxu0 0.0
          %996 = vmatpush1.msra.mxu0 0.0
          %997 = vmatprep.mubr.f32.mxu0 0.0
          %998 = vmatmul.mubr.f32.gmra.mrb[0].mxu0 %v931
          %v999 = vpop.f32.mrb[0].mxu0
          %v1000 = vadd.f32 %v927, %v999
          %v1001 = vpop.f32.mrb[0].mxu0
          %1002 = vdwg.mxu0
          %v1003 = vmax.f32 %v1000, 0.0
          %v1004 = vld [vmem:[%s9] sm:$0xff]
          %v1005 = vld [vmem:[%s9 + $0x8] sm:$0xff]
          %v1006 = vld [vmem:[%s9 + $0x10] sm:$0xff]
          %v1007 = vld [vmem:[%s9 + $0x18] sm:$0xff]
          %v1008 = vld [vmem:[%s10] sm:$0x1]
          %v1010 = vlaneseq
          %v1011 = vshrl.u32 %v1010, 7
          %v1012 = vsub.s32 0, %v1011
          %v1013 = vrot.slane %v1008, %v1012
          %v1016 = vsel %vm470, %v1003, 0
          %1018 = vmatprep.subr.mxu0 0.0
          %1019 = vmatpush1.msra.mxu0 %v1004
          %1020 = vmatprep.subr.mxu0 0.0
          %1021 = vmatpush1.msra.mxu0 %v1005
          %1022 = vmatprep.subr.mxu0 0.0
          %1023 = vmatpush1.msra.mxu0 %v1006
          %1024 = vmatprep.subr.mxu0 0.0
          %1025 = vmatpush1.msra.mxu0 %v1007
          %1026 = vmatprep.subr.mxu0 0.0
          %1027 = vmatpush1.msra.mxu0 0.0
          %1028 = vmatprep.subr.mxu0 0.0
          %1029 = vmatpush1.msra.mxu0 0.0
          %1030 = vmatprep.subr.mxu0 0.0
          %1031 = vmatpush1.msra.mxu0 0.0
          %1032 = vmatprep.subr.mxu0 0.0
          %1033 = vmatpush1.msra.mxu0 0.0
          %1034 = vmatprep.subr.mxu0 0.0
          %1035 = vmatpush1.msra.mxu0 0.0
          %1036 = vmatprep.subr.mxu0 0.0
          %1037 = vmatpush1.msra.mxu0 0.0
          %1038 = vmatprep.subr.mxu0 0.0
          %1039 = vmatpush1.msra.mxu0 0.0
          %1040 = vmatprep.subr.mxu0 0.0
          %1041 = vmatpush1.msra.mxu0 0.0
          %1042 = vmatprep.subr.mxu0 0.0
          %1043 = vmatpush1.msra.mxu0 0.0
          %1044 = vmatprep.subr.mxu0 0.0
          %1045 = vmatpush1.msra.mxu0 0.0
          %1046 = vmatprep.subr.mxu0 0.0
          %1047 = vmatpush1.msra.mxu0 0.0
          %1048 = vmatprep.subr.mxu0 0.0
          %1049 = vmatpush1.msra.mxu0 0.0
          %1050 = vmatprep.subr.mxu0 0.0
          %1051 = vmatpush1.msra.mxu0 0.0
          %1052 = vmatprep.subr.mxu0 0.0
          %1053 = vmatpush1.msra.mxu0 0.0
          %1054 = vmatprep.subr.mxu0 0.0
          %1055 = vmatpush1.msra.mxu0 0.0
          %1056 = vmatprep.subr.mxu0 0.0
          %1057 = vmatpush1.msra.mxu0 0.0
          %1058 = vmatprep.subr.mxu0 0.0
          %1059 = vmatpush1.msra.mxu0 0.0
          %1060 = vmatprep.subr.mxu0 0.0
          %1061 = vmatpush1.msra.mxu0 0.0
          %1062 = vmatprep.subr.mxu0 0.0
          %1063 = vmatpush1.msra.mxu0 0.0
          %1064 = vmatprep.subr.mxu0 0.0
          %1065 = vmatpush1.msra.mxu0 0.0
          %1066 = vmatprep.subr.mxu0 0.0
          %1067 = vmatpush1.msra.mxu0 0.0
          %1068 = vmatprep.subr.mxu0 0.0
          %1069 = vmatpush1.msra.mxu0 0.0
          %1070 = vmatprep.subr.mxu0 0.0
          %1071 = vmatpush1.msra.mxu0 0.0
          %1072 = vmatprep.subr.mxu0 0.0
          %1073 = vmatpush1.msra.mxu0 0.0
          %1074 = vmatprep.subr.mxu0 0.0
          %1075 = vmatpush1.msra.mxu0 0.0
          %1076 = vmatprep.subr.mxu0 0.0
          %1077 = vmatpush1.msra.mxu0 0.0
          %1078 = vmatprep.subr.mxu0 0.0
          %1079 = vmatpush1.msra.mxu0 0.0
          %1080 = vmatprep.subr.mxu0 0.0
          %1081 = vmatpush1.msra.mxu0 0.0
          %1082 = vmatprep.mubr.f32.mxu0 0.0
          %1083 = vmatmul.mubr.f32.gmra.mrb[0].mxu0 %v1016
          %v1084 = vpop.f32.mrb[0].mxu0
          %v1085 = vadd.f32 %v1013, %v1084
          %v1086 = vpop.f32.mrb[0].mxu0
          %1087 = vdwg.mxu0
          %1088 = vst [vmem:[%s402] sm:$0xff] %v1085
        $region72: #{tpu_custom_call.1} parent=63 // pred_fallthru
          _
        %s1089 = sand.u32 %s283, 1
        %s1090 = scalar_lea.sflag [#allocation4], %s1089
        %s1091 = sand.u32 %s283, 1
        %s1092 = smul.addr %s1091, 8
        %s1093 = scalar_lea.vmem [#allocation3], %s1092
        // Predicated region
        $region73: #{tpu_custom_call.1} parent=63 // pred_check
          %p1094 = pneg %p293
        $region74: #{tpu_custom_call.1} parent=63 // pred_check_branch
          %1096 = sbr.rel (%p1094) target = $region76
        $region75: #{tpu_custom_call.1} parent=63 // pred_region
          %s1098 = ssub.s32 128, 128
          %1099 = vsyncadd %s1090, %s1098
          %s1100 = smul.addr %s29, 128
          %s1101 = scalar_lea.hbm %s11, %s1100
          %s1103 = sshll.u32 %s1093, 4
          %s1104 = int_to_ptr.vmem [resolvable:$true] %s1103
          %1106 = dma.vmem_to_hbm [thread:$0]  %s1104, 128, %s1101, %s1090
        $region76: #{tpu_custom_call.1} parent=63 // pred_fallthru
          _
      $region64: #{tpu_custom_call.1} parent=5 // pred_fallthru
        _
      %p1107 = scmp.le.s32.totalorder 2, %s20
      // Predicated region
      $region77: #{tpu_custom_call.1} parent=5 // pred_check
        %p1108 = pneg %p1107
      $region78: #{tpu_custom_call.1} parent=5 // pred_check_branch
        %1110 = sbr.rel (%p1108) target = $region80
      $region79: #{tpu_custom_call.1} parent=5 // pred_region
        %s1111 = ssub.s32 %s20, 2
        // Predicated region
        $region81: #{tpu_custom_call.1} parent=79 // pred_check
          %p1112 = pneg %p299
        $region82: #{tpu_custom_call.1} parent=79 // pred_check_branch
          %1114 = sbr.rel (%p1112) target = $region84
        $region83: #{tpu_custom_call.1} parent=79 // pred_region
          %s1115 = sand.u32 %s284, 1
          %s1116 = scalar_lea.sflag [#allocation4], %s1115
          %s1117 = sand.u32 %s284, 1
          %s1118 = smul.addr %s1117, 8
          %s1119 = scalar_lea.vmem [#allocation3], %s1118
          %1120 = dma.done %s1116, 128
        $region84: #{tpu_custom_call.1} parent=79 // pred_fallthru
          _
      $region80: #{tpu_custom_call.1} parent=5 // pred_fallthru
        _
    $region6: #{tpu_custom_call.1} parent=1 // loop_footer
      %s24 = sadd.s32 1, %s20
    $region7: #{tpu_custom_call.1} parent=1 // loop_footer_branch
      %19 = sbr.rel target = $region3
    $region8: #{tpu_custom_call.1} parent=1 // loop_exit
      _
    %1121 = vsyncpa [#allocation4], 1
    %s1122 = scalar_lea.sflag [#allocation4], 1
    %1123 = vsyncpa %s1122, 1

</llo_original>
